<compile_context>
chip_gen: v7x
topology: tpu7x:2x2x1
jax: 0.10.0
libtpu: 0.0.40
codegen_flags: <defaults>
</compile_context>

<pallas_src>
import functools

import jax
import jax.numpy as jnp
from jax.experimental import pallas as pl
from jax.experimental.pallas import tpu as pltpu

IN_F = 7
H1 = 128
H2 = 64


def _round_up(n: int, m: int) -> int:
    return ((n + m - 1) // m) * m


def heightnet_kernel(x_ref, w1t_ref, b1_ref, w2t_ref, b2_ref, w3_ref, b3_ref, o_ref):
    # x_ref  : (TB, 7)   f32   (natural layout: batch on sublanes, features on lanes)
    # w1t_ref: (7, 128)  bf16   b1_ref: (1, 128) f32
    # w2t_ref: (128, 64) bf16   b2_ref: (1, 64)  f32
    # w3_ref : (1, 64)   f32    b3_ref: (1,)     f32 (SMEM scalar)
    # o_ref  : (TB, 1)   f32

    # fc1 + relu: (TB, 7) @ (7, 128) -> (TB, 128).  bf16 inputs, f32 accumulation;
    # weights are the stationary MXU operand, batch streams as M.
    x_bf = x_ref[...].astype(jnp.bfloat16)
    h1 = jnp.dot(x_bf, w1t_ref[...], preferred_element_type=jnp.float32)
    h1 = jnp.maximum(h1 + b1_ref[...], 0.0)

    # fc2 + relu: (TB, 128) @ (128, 64) -> (TB, 64).  w2^T is pushed once per tile,
    # the TB batch rows stream through — the orientation fix for v6e/v7x MXUs.
    h2 = jnp.dot(h1.astype(jnp.bfloat16), w2t_ref[...],
                 preferred_element_type=jnp.float32)
    h2 = jnp.maximum(h2 + b2_ref[...], 0.0)

    # fc3 (64 -> 1): VPU multiply + cross-lane (XLU) reduction; keeps the MXU free.
    out = jnp.sum(h2 * w3_ref[...], axis=1, keepdims=True) + b3_ref[0]
    o_ref[...] = out.astype(o_ref.dtype)


def _choose_tile(b_pad: int, max_tb: int) -> int:
    """One tile for small batches; otherwise a large multiple of 512 capped so the
    grid keeps >= ~4 steps (megacore sharding + double-buffering slack)."""
    if b_pad <= max_tb:
        return b_pad                      # single tile (b_pad is a multiple of 8)
    tb = _round_up(pl.cdiv(b_pad, 4), 512)
    return max(512, min(max_tb, tb))


@functools.partial(jax.jit, static_argnames=("max_tb",))
def heightnet_forward(x, params, max_tb: int = 4096):
    """x: [B, 7] float32 -> [B, 1] float32 (matches PyTorch HeightNet.forward).

    max_tb: batch-tile cap.  4096 fits every generation with the 48 MiB limit set
    below; 8192 also works (v5e/v6e: 128 MiB physical VMEM, v7x: 64 MiB)."""
    w1, b1, w2, b2, w3, b3 = params  # PyTorch layouts: (128,7),(128,),(64,128),(64,),(1,64),(1,)
    B = x.shape[0]

    # Only wrapper-side work on x: optional <=7-row pad so batch is a multiple of 8
    # sublanes.  No transpose, no dtype cast, no full-tile padding — uneven last
    # blocks are handled by Pallas (padding rows never mix across batch rows and are
    # not written back).
    B_pad = _round_up(max(B, 8), 8)
    x = x.astype(jnp.float32)
    if B_pad != B:
        x = jnp.pad(x, ((0, B_pad - B), (0, 0)))

    TB = _choose_tile(B_pad, max_tb)
    grid = (pl.cdiv(B_pad, TB),)

    # Tiny weight tensors: prep/cast in the wrapper; VMEM-resident across all grid
    # steps via constant index_maps.
    w1t = w1.T.astype(jnp.bfloat16)                 # (7, 128)
    w2t = w2.T.astype(jnp.bfloat16)                 # (128, 64)
    b1r = b1.reshape(1, -1).astype(jnp.float32)     # (1, 128)
    b2r = b2.reshape(1, -1).astype(jnp.float32)     # (1, 64)
    w3r = w3.reshape(1, -1).astype(jnp.float32)     # (1, 64)
    b3s = b3.reshape(1).astype(jnp.float32)         # (1,) SMEM scalar

    out = pl.pallas_call(
        heightnet_kernel,
        out_shape=jax.ShapeDtypeStruct((B_pad, 1), jnp.float32),
        grid_spec=pltpu.PrefetchScalarGridSpec(
            num_scalar_prefetch=0,
            grid=grid,
            in_specs=[
                pl.BlockSpec((TB, IN_F), lambda i: (i, 0)),          # x: streamed
                pl.BlockSpec((IN_F, H1), lambda i: (0, 0)),          # w1^T: resident
                pl.BlockSpec((1, H1), lambda i: (0, 0)),             # b1: resident
                pl.BlockSpec((H1, H2), lambda i: (0, 0)),            # w2^T: resident
                pl.BlockSpec((1, H2), lambda i: (0, 0)),             # b2: resident
                pl.BlockSpec((1, H2), lambda i: (0, 0)),             # w3: resident
                pl.BlockSpec(memory_space=pltpu.MemorySpace.SMEM),   # b3 scalar
            ],
            out_specs=pl.BlockSpec((TB, 1), lambda i: (i, 0)),
        ),
        compiler_params=pltpu.CompilerParams(
            dimension_semantics=("parallel",),
            vmem_limit_bytes=48 * 1024 * 1024,
        ),
    )(x, w1t, b1r, w2t, b2r, w3r, b3s)

    return out if B_pad == B else out[:B]


def init_params(key):
    """nn.Linear-style init (U(-1/sqrt(fan_in), +1/sqrt(fan_in))), PyTorch layouts."""
    dims = [(IN_F, H1), (H1, H2), (H2, 1)]
    params = []
    for fan_in, fan_out in dims:
        kw, kb, key = jax.random.split(key, 3)
        bound = 1.0 / jnp.sqrt(fan_in)
        w = jax.random.uniform(kw, (fan_out, fan_in), jnp.float32, -bound, bound)
        b = jax.random.uniform(kb, (fan_out,), jnp.float32, -bound, bound)
        params += [w, b]
    return tuple(params)


def reference_forward(x, params):
    """Plain-JAX reference mirroring the kernel's bf16 matmul inputs / f32 accumulation."""
    w1, b1, w2, b2, w3, b3 = params
    xb = x.astype(jnp.bfloat16)
    h1 = jnp.maximum(
        jnp.dot(xb, w1.T.astype(jnp.bfloat16), preferred_element_type=jnp.float32)
        + b1[None, :], 0.0)
    h2 = jnp.maximum(
        jnp.dot(h1.astype(jnp.bfloat16), w2.T.astype(jnp.bfloat16),
                preferred_element_type=jnp.float32) + b2[None, :], 0.0)
    out = jnp.sum(h2 * w3[0][None, :], axis=-1, keepdims=True) + b3[0]
    return out


if __name__ == "__main__":
    key = jax.random.PRNGKey(0)
    kx, kp = jax.random.split(key)

    B = 8  # small batch; exercises the single-tile path (TB == B_pad)
    x = jax.random.normal(kx, (B, IN_F), jnp.float32)
    params = init_params(kp)

    out = heightnet_forward(x, params)
    jax.block_until_ready(out)

    ref = reference_forward(x, params)
    assert out.shape == (B, 1)
    err = jnp.max(jnp.abs(out - ref))
    assert jnp.allclose(out, ref, atol=2e-3, rtol=2e-3), f"max abs err {err}"

    print("KERNEL_OK")
</pallas_src>

<mosaic_0001>
module attributes {stable_mosaic.version = 11 : i64} {
  func.func @heightnet_kernel(%arg0: i32, %arg1: memref<8x7xf32, #tpu.memory_space<vmem>>, %arg2: memref<7x128xbf16, #tpu.memory_space<vmem>>, %arg3: memref<1x128xf32, #tpu.memory_space<vmem>>, %arg4: memref<128x64xbf16, #tpu.memory_space<vmem>>, %arg5: memref<1x64xf32, #tpu.memory_space<vmem>>, %arg6: memref<1x64xf32, #tpu.memory_space<vmem>>, %arg7: memref<1xf32, #tpu.memory_space<smem>>, %arg8: memref<8x1xf32, #tpu.memory_space<vmem>>) attributes {dimension_semantics = [#tpu.dimension_semantics<parallel>], iteration_bounds = array<i64: 1>, scalar_prefetch = 0 : i64, scratch_operands = 0 : i64, tpu.core_type = #tpu.core_type<tc>, window_params = [{transform_indices = @transform_0, window_bounds = array<i64: 8, 7>}, {pipeline_mode = #tpu.pipeline_mode<synchronous>, transform_indices = @transform_1, window_bounds = array<i64: 7, 128>}, {pipeline_mode = #tpu.pipeline_mode<synchronous>, transform_indices = @transform_2, window_bounds = array<i64: 1, 128>}, {pipeline_mode = #tpu.pipeline_mode<synchronous>, transform_indices = @transform_3, window_bounds = array<i64: 128, 64>}, {pipeline_mode = #tpu.pipeline_mode<synchronous>, transform_indices = @transform_4, window_bounds = array<i64: 1, 64>}, {pipeline_mode = #tpu.pipeline_mode<synchronous>, transform_indices = @transform_5, window_bounds = array<i64: 1, 64>}, {transform_indices = @transform_6, window_bounds = array<i64: 1>}, {transform_indices = @transform_7, window_bounds = array<i64: 8, 1>}]} {
    %c0 = arith.constant 0 : index
    %c0_0 = arith.constant 0 : index
    %0 = vector.load %arg1[%c0, %c0_0] : memref<8x7xf32, #tpu.memory_space<vmem>>, vector<8x7xf32>
    %1 = arith.truncf %0 : vector<8x7xf32> to vector<8x7xbf16>
    %c0_1 = arith.constant 0 : index
    %c0_2 = arith.constant 0 : index
    %2 = vector.load %arg2[%c0_1, %c0_2] : memref<7x128xbf16, #tpu.memory_space<vmem>>, vector<7x128xbf16>
    %cst = arith.constant dense<0.000000e+00> : vector<8x128xf32>
    %3 = tpu.matmul %1, %2, %cst {dimension_numbers = #tpu.dot_dimension_numbers<[1], [0], [0], [1], [0, 0, 1, 1], [], []>} : vector<8x7xbf16>, vector<7x128xbf16>, vector<8x128xf32> -> vector<8x128xf32>
    %c0_3 = arith.constant 0 : index
    %c0_4 = arith.constant 0 : index
    %4 = vector.load %arg3[%c0_3, %c0_4] : memref<1x128xf32, #tpu.memory_space<vmem>>, vector<1x128xf32>
    %5 = vector.broadcast %4 : vector<1x128xf32> to vector<8x128xf32>
    %6 = arith.addf %3, %5 : vector<8x128xf32>
    %cst_5 = arith.constant 0.000000e+00 : f32
    %7 = vector.broadcast %cst_5 : f32 to vector<8x128xf32>
    %8 = arith.maximumf %6, %7 : vector<8x128xf32>
    %9 = arith.truncf %8 : vector<8x128xf32> to vector<8x128xbf16>
    %c0_6 = arith.constant 0 : index
    %c0_7 = arith.constant 0 : index
    %10 = vector.load %arg4[%c0_6, %c0_7] : memref<128x64xbf16, #tpu.memory_space<vmem>>, vector<128x64xbf16>
    %cst_8 = arith.constant dense<0.000000e+00> : vector<8x64xf32>
    %11 = tpu.matmul %9, %10, %cst_8 {dimension_numbers = #tpu.dot_dimension_numbers<[1], [0], [0], [1], [0, 0, 1, 1], [], []>} : vector<8x128xbf16>, vector<128x64xbf16>, vector<8x64xf32> -> vector<8x64xf32>
    %c0_9 = arith.constant 0 : index
    %c0_10 = arith.constant 0 : index
    %12 = vector.load %arg5[%c0_9, %c0_10] : memref<1x64xf32, #tpu.memory_space<vmem>>, vector<1x64xf32>
    %13 = vector.broadcast %12 : vector<1x64xf32> to vector<8x64xf32>
    %14 = arith.addf %11, %13 : vector<8x64xf32>
    %cst_11 = arith.constant 0.000000e+00 : f32
    %15 = vector.broadcast %cst_11 : f32 to vector<8x64xf32>
    %16 = arith.maximumf %14, %15 : vector<8x64xf32>
    %c0_12 = arith.constant 0 : index
    %c0_13 = arith.constant 0 : index
    %17 = vector.load %arg6[%c0_12, %c0_13] : memref<1x64xf32, #tpu.memory_space<vmem>>, vector<1x64xf32>
    %18 = vector.broadcast %17 : vector<1x64xf32> to vector<8x64xf32>
    %19 = arith.mulf %16, %18 : vector<8x64xf32>
    %cst_14 = arith.constant dense<0.000000e+00> : vector<8xf32>
    %20 = vector.multi_reduction <add>, %19, %cst_14 [1] : vector<8x64xf32> to vector<8xf32>
    %21 = vector.shape_cast %20 : vector<8xf32> to vector<8x1xf32>
    %c0_15 = arith.constant 0 : index
    %22 = memref.load %arg7[%c0_15] : memref<1xf32, #tpu.memory_space<smem>>
    %23 = vector.broadcast %22 : f32 to vector<8x1xf32>
    %24 = arith.addf %21, %23 : vector<8x1xf32>
    %c0_16 = arith.constant 0 : index
    %c0_17 = arith.constant 0 : index
    %25 = vector.load %arg8[%c0_16, %c0_17] : memref<8x1xf32, #tpu.memory_space<vmem>>, vector<8x1xf32>
    tpu.vector_store %arg8[%c0_16, %c0_17], %24 {strides = array<i32>} : memref<8x1xf32, #tpu.memory_space<vmem>>, vector<8x1xf32>,
    return
  }
  func.func @transform_0(%arg0: i32) -> (i32, i32) {
    %c0_i32 = arith.constant 0 : i32
    %c0_i32_0 = arith.constant 0 : i32
    return %arg0, %c0_i32 : i32, i32
  }
  func.func @transform_1(%arg0: i32) -> (i32, i32) {
    %c0_i32 = arith.constant 0 : i32
    %c0_i32_0 = arith.constant 0 : i32
    %c0_i32_1 = arith.constant 0 : i32
    return %c0_i32, %c0_i32_0 : i32, i32
  }
  func.func @transform_2(%arg0: i32) -> (i32, i32) {
    %c0_i32 = arith.constant 0 : i32
    %c0_i32_0 = arith.constant 0 : i32
    %c0_i32_1 = arith.constant 0 : i32
    return %c0_i32, %c0_i32_0 : i32, i32
  }
  func.func @transform_3(%arg0: i32) -> (i32, i32) {
    %c0_i32 = arith.constant 0 : i32
    %c0_i32_0 = arith.constant 0 : i32
    %c0_i32_1 = arith.constant 0 : i32
    return %c0_i32, %c0_i32_0 : i32, i32
  }
  func.func @transform_4(%arg0: i32) -> (i32, i32) {
    %c0_i32 = arith.constant 0 : i32
    %c0_i32_0 = arith.constant 0 : i32
    %c0_i32_1 = arith.constant 0 : i32
    return %c0_i32, %c0_i32_0 : i32, i32
  }
  func.func @transform_5(%arg0: i32) -> (i32, i32) {
    %c0_i32 = arith.constant 0 : i32
    %c0_i32_0 = arith.constant 0 : i32
    %c0_i32_1 = arith.constant 0 : i32
    return %c0_i32, %c0_i32_0 : i32, i32
  }
  func.func @transform_6(%arg0: i32) -> i32 {
    %c0_i32 = arith.constant 0 : i32
    %c0_i32_0 = arith.constant 0 : i32
    return %c0_i32 : i32
  }
  func.func @transform_7(%arg0: i32) -> (i32, i32) {
    %c0_i32 = arith.constant 0 : i32
    %c0_i32_0 = arith.constant 0 : i32
    return %arg0, %c0_i32 : i32, i32
  }
}

</mosaic_0001>

<llo_original>
// kernel: heightnet_forward.1
$region0: #{heightnet_forward.1}
  #allocation0 [shape = 'u32[]', space=smem, size = 0x4, offset = 0x4, fixed_abs, tag = 'smem constant byte address 0x4 - core index']
  #allocation1 [shape = 'u32[144,128]{1,0:T(1,128)}', space=vmem, size = 0x12000, scoped, tag = 'internal scratch']
  #allocation2 [shape = 'f32[1]{0:T(128)S(6)}', space=smem, size = 0x200, scoped, tag = 'scoped memory for heightnet_forward.1']
  %s0 = inlined_call_operand.vmem [shape: f32[8,7], index: 0, kind: input, shape index: {}]
  %s1 = inlined_call_operand.vmem [shape: bf16[7,128], index: 1, kind: input, shape index: {}]
  %s2 = inlined_call_operand.vmem [shape: f32[1,128], index: 2, kind: input, shape index: {}]
  %s3 = inlined_call_operand.vmem [shape: bf16[128,64], index: 3, kind: input, shape index: {}]
  %s4 = inlined_call_operand.vmem [shape: f32[1,64], index: 4, kind: input, shape index: {}]
  %s5 = inlined_call_operand.vmem [shape: f32[1,64], index: 5, kind: input, shape index: {}]
  %s6 = inlined_call_operand.<no memory space> [shape: f32[1], index: 6, kind: input, shape index: {}]
  %s7 = inlined_call_operand.vmem [shape: f32[8,1], index: 7, kind: output, shape index: {}]
  %s8 = sld [smem:[#allocation0]]
  $region38: #{heightnet_forward.1} parent=0
    _
  %s10 = ssub.s32 1, %s8
  %s11 = scalar_select 0, %s10, %s8
  %12 = sst [smem:[#allocation2]] %s6
  // Predicated region
  $region2: #{heightnet_forward.1} parent=0 // pred_check
    _
  $region3: #{heightnet_forward.1} parent=0 // pred_check_branch
    %14 = sbr.rel (0) target = $region5
  $region4: #{heightnet_forward.1} parent=0 // pred_region
    _
  $region5: #{heightnet_forward.1} parent=0 // pred_fallthru
    _
  // Predicated region
  $region6: #{heightnet_forward.1} parent=0 // pred_check
    _
  $region7: #{heightnet_forward.1} parent=0 // pred_check_branch
    %16 = sbr.rel (0) target = $region9
  $region8: #{heightnet_forward.1} parent=0 // pred_region
    _
  $region9: #{heightnet_forward.1} parent=0 // pred_fallthru
    _
  // Predicated region
  $region10: #{heightnet_forward.1} parent=0 // pred_check
    _
  $region11: #{heightnet_forward.1} parent=0 // pred_check_branch
    %18 = sbr.rel (0) target = $region13
  $region12: #{heightnet_forward.1} parent=0 // pred_region
    _
  $region13: #{heightnet_forward.1} parent=0 // pred_fallthru
    _
  // Predicated region
  $region14: #{heightnet_forward.1} parent=0 // pred_check
    _
  $region15: #{heightnet_forward.1} parent=0 // pred_check_branch
    %20 = sbr.rel (0) target = $region17
  $region16: #{heightnet_forward.1} parent=0 // pred_region
    _
  $region17: #{heightnet_forward.1} parent=0 // pred_fallthru
    _
  // Predicated region
  $region18: #{heightnet_forward.1} parent=0 // pred_check
    _
  $region19: #{heightnet_forward.1} parent=0 // pred_check_branch
    %22 = sbr.rel (0) target = $region21
  $region20: #{heightnet_forward.1} parent=0 // pred_region
    _
  $region21: #{heightnet_forward.1} parent=0 // pred_fallthru
    _
  // Predicated region
  $region22: #{heightnet_forward.1} parent=0 // pred_check
    _
  $region23: #{heightnet_forward.1} parent=0 // pred_check_branch
    %24 = sbr.rel (0) target = $region25
  $region24: #{heightnet_forward.1} parent=0 // pred_region
    _
  $region25: #{heightnet_forward.1} parent=0 // pred_fallthru
    _
  // Predicated region
  $region26: #{heightnet_forward.1} parent=0 // pred_check
    _
  $region27: #{heightnet_forward.1} parent=0 // pred_check_branch
    %26 = sbr.rel (0) target = $region29
  $region28: #{heightnet_forward.1} parent=0 // pred_region
    _
  $region29: #{heightnet_forward.1} parent=0 // pred_fallthru
    _
  %v28 = vld [vmem:[%s0] sm:$0xff]
  %v29 = vpack.c.bf16 %v28, %v28
  %v30 = vld [vmem:[%s1] sm:$0xf]
  %v31 = vld [vmem:[%s2] sm:$0x1]
  %v33 = vlaneseq
  %v34 = vshrl.u32 %v33, 7
  %v35 = vsub.s32 0, %v34
  %v36 = vrot.slane %v31, %v35
  %vm38 = vcmask 56320
  %v40 = vsel %vm38, %v29, 0
  %vm42 = vcmask 1042432
  %vm43 = vcmask 1043456
  %v44 = vsel %vm42, 4294967295, 65535
  %v45 = vsel %vm43, %v44, 0
  %v47 = vand.u32 %v30, %v45
  %49 = vmatprep.subr.bf16.mxu0 0
  %50 = vmatpush1.bf16.msra.mxu0 %v47
  %51 = vmatprep.subr.bf16.mxu0 0
  %52 = vmatpush1.bf16.msra.mxu0 0
  %53 = vmatprep.subr.bf16.mxu0 0
  %54 = vmatpush1.bf16.msra.mxu0 0
  %55 = vmatprep.subr.bf16.mxu0 0
  %56 = vmatpush1.bf16.msra.mxu0 0
  %57 = vmatprep.subr.bf16.mxu0 0
  %58 = vmatpush1.bf16.msra.mxu0 0
  %59 = vmatprep.subr.bf16.mxu0 0
  %60 = vmatpush1.bf16.msra.mxu0 0
  %61 = vmatprep.subr.bf16.mxu0 0
  %62 = vmatpush1.bf16.msra.mxu0 0
  %63 = vmatprep.subr.bf16.mxu0 0
  %64 = vmatpush1.bf16.msra.mxu0 0
  %65 = vmatprep.subr.bf16.mxu0 0
  %66 = vmatpush1.bf16.msra.mxu0 0
  %67 = vmatprep.subr.bf16.mxu0 0
  %68 = vmatpush1.bf16.msra.mxu0 0
  %69 = vmatprep.subr.bf16.mxu0 0
  %70 = vmatpush1.bf16.msra.mxu0 0
  %71 = vmatprep.subr.bf16.mxu0 0
  %72 = vmatpush1.bf16.msra.mxu0 0
  %73 = vmatprep.subr.bf16.mxu0 0
  %74 = vmatpush1.bf16.msra.mxu0 0
  %75 = vmatprep.subr.bf16.mxu0 0
  %76 = vmatpush1.bf16.msra.mxu0 0
  %77 = vmatprep.subr.bf16.mxu0 0
  %78 = vmatpush1.bf16.msra.mxu0 0
  %79 = vmatprep.subr.bf16.mxu0 0
  %80 = vmatpush1.bf16.msra.mxu0 0
  %81 = vmatprep.mubr.bf16.mxu0 0
  %82 = vmatmul.mubr.bf16.gmra.mrb[0].mxu0 %v40
  %v83 = vpop.f32.mrb[0].mxu0
  %v84 = vadd.f32 %v36, %v83
  %v85 = vpop.f32.mrb[0].mxu0
  %v86 = vpop.f32.mrb[0].mxu0
  %v87 = vpop.f32.mrb[0].mxu0
  %88 = vdwg.mxu0
  %v89 = vmax.f32 %v84, 0.0
  %v90 = vpack.c.bf16 %v89, %v89
  %v91 = vld [vmem:[%s3] sm:$0xf]
  %v92 = vld [vmem:[%s3 + $0x4] sm:$0xf]
  %v93 = vld [vmem:[%s3 + $0x8] sm:$0xf]
  %v94 = vld [vmem:[%s3 + $0xc] sm:$0xf]
  %v95 = vld [vmem:[%s3 + $0x10] sm:$0xf]
  %v96 = vld [vmem:[%s3 + $0x14] sm:$0xf]
  %v97 = vld [vmem:[%s3 + $0x18] sm:$0xf]
  %v98 = vld [vmem:[%s3 + $0x1c] sm:$0xf]
  %v99 = vld [vmem:[%s3 + $0x20] sm:$0xf]
  %v100 = vld [vmem:[%s3 + $0x24] sm:$0xf]
  %v101 = vld [vmem:[%s3 + $0x28] sm:$0xf]
  %v102 = vld [vmem:[%s3 + $0x2c] sm:$0xf]
  %v103 = vld [vmem:[%s3 + $0x30] sm:$0xf]
  %v104 = vld [vmem:[%s3 + $0x34] sm:$0xf]
  %v105 = vld [vmem:[%s3 + $0x38] sm:$0xf]
  %v106 = vld [vmem:[%s3 + $0x3c] sm:$0xf]
  %v107 = vld [vmem:[%s4] sm:$0x1]
  %v109 = vlaneseq
  %v110 = vshrl.u32 %v109, 7
  %v111 = vsub.s32 0, %v110
  %v112 = vrot.slane %v107, %v111
  %v130 = vunpack.c.l.b16 %v91
  %v131 = vunpack.c.l.b16 %v92
  %v132 = vunpack.c.l.b16 %v93
  %v133 = vunpack.c.l.b16 %v94
  %v134 = vunpack.c.l.b16 %v95
  %v135 = vunpack.c.l.b16 %v96
  %v136 = vunpack.c.l.b16 %v97
  %v137 = vunpack.c.l.b16 %v98
  %v138 = vunpack.c.l.b16 %v99
  %v139 = vunpack.c.l.b16 %v100
  %v140 = vunpack.c.l.b16 %v101
  %v141 = vunpack.c.l.b16 %v102
  %v142 = vunpack.c.l.b16 %v103
  %v143 = vunpack.c.l.b16 %v104
  %v144 = vunpack.c.l.b16 %v105
  %v145 = vunpack.c.l.b16 %v106
  %v146 = vpack.c.b16 %v131, %v130
  %v147 = vpack.c.b16 %v133, %v132
  %v148 = vpack.c.b16 %v135, %v134
  %v149 = vpack.c.b16 %v137, %v136
  %v150 = vpack.c.b16 %v139, %v138
  %v151 = vpack.c.b16 %v141, %v140
  %v152 = vpack.c.b16 %v143, %v142
  %v153 = vpack.c.b16 %v145, %v144
  %162 = vmatprep.subr.bf16.mxu0 0
  %163 = vmatpush1.bf16.msra.mxu0 %v146
  %164 = vmatprep.subr.bf16.mxu0 0
  %165 = vmatpush1.bf16.msra.mxu0 %v147
  %166 = vmatprep.subr.bf16.mxu0 0
  %167 = vmatpush1.bf16.msra.mxu0 %v148
  %168 = vmatprep.subr.bf16.mxu0 0
  %169 = vmatpush1.bf16.msra.mxu0 %v149
  %170 = vmatprep.subr.bf16.mxu0 0
  %171 = vmatpush1.bf16.msra.mxu0 %v150
  %172 = vmatprep.subr.bf16.mxu0 0
  %173 = vmatpush1.bf16.msra.mxu0 %v151
  %174 = vmatprep.subr.bf16.mxu0 0
  %175 = vmatpush1.bf16.msra.mxu0 %v152
  %176 = vmatprep.subr.bf16.mxu0 0
  %177 = vmatpush1.bf16.msra.mxu0 %v153
  %178 = vmatprep.subr.bf16.mxu0 0
  %179 = vmatpush1.bf16.msra.mxu0 0
  %180 = vmatprep.subr.bf16.mxu0 0
  %181 = vmatpush1.bf16.msra.mxu0 0
  %182 = vmatprep.subr.bf16.mxu0 0
  %183 = vmatpush1.bf16.msra.mxu0 0
  %184 = vmatprep.subr.bf16.mxu0 0
  %185 = vmatpush1.bf16.msra.mxu0 0
  %186 = vmatprep.subr.bf16.mxu0 0
  %187 = vmatpush1.bf16.msra.mxu0 0
  %188 = vmatprep.subr.bf16.mxu0 0
  %189 = vmatpush1.bf16.msra.mxu0 0
  %190 = vmatprep.subr.bf16.mxu0 0
  %191 = vmatpush1.bf16.msra.mxu0 0
  %192 = vmatprep.subr.bf16.mxu0 0
  %193 = vmatpush1.bf16.msra.mxu0 0
  %194 = vmatprep.mubr.bf16.mxu0 0
  %195 = vmatmul.mubr.bf16.gmra.mrb[0].mxu0 %v90
  %v196 = vpop.f32.mrb[0].mxu0
  %v197 = vadd.f32 %v112, %v196
  %v198 = vpop.f32.mrb[0].mxu0
  %v199 = vpop.f32.mrb[0].mxu0
  %v200 = vpop.f32.mrb[0].mxu0
  %201 = vdwg.mxu0
  %v202 = vmax.f32 %v197, 0.0
  %v203 = vld [vmem:[%s5] sm:$0x1]
  %v205 = vlaneseq
  %v206 = vshrl.u32 %v205, 7
  %v207 = vsub.s32 0, %v206
  %v208 = vrot.slane %v203, %v207
  %v210 = vmul.f32 %v202, %v208
  %vm211 = vcmask 523264
  %v212 = vsel %vm211, %v210, 0.0
  %213 = vadd.xlane.f32.xlu0 %v212
  %v214 = vpop.xlane.xlu0 %213
  %s215 = sld [smem:[#allocation2]]
  %v216 = vstv %s215
  %v217 = vadd.f32 %v214, %v216
  %vm218 = vcmask 7168
  %219 = vst.msk [vmem:[%s7] sm:$0xff] %vm218, %v217
  // Predicated region
  $region30: #{heightnet_forward.1} parent=0 // pred_check
    _
  $region31: #{heightnet_forward.1} parent=0 // pred_check_branch
    %221 = sbr.rel (0) target = $region33
  $region32: #{heightnet_forward.1} parent=0 // pred_region
    _
  $region33: #{heightnet_forward.1} parent=0 // pred_fallthru
    _
  // Predicated region
  $region34: #{heightnet_forward.1} parent=0 // pred_check
    _
  $region35: #{heightnet_forward.1} parent=0 // pred_check_branch
    %223 = sbr.rel (0) target = $region37
  $region36: #{heightnet_forward.1} parent=0 // pred_region
    _
  $region37: #{heightnet_forward.1} parent=0 // pred_fallthru
    _

</llo_original>
